<compile_context>
chip_gen: v5e
topology: v5e:2x2
jax: 0.10.0
libtpu: 0.0.40
codegen_flags: <defaults>
</compile_context>

<pallas_src>
import functools

import jax
import jax.numpy as jnp
from jax.experimental import pallas as pl
from jax.experimental.pallas import tpu as pltpu

_LANE = 128       # lane width (last dim)
_SUBLANE = 8      # sublane width (second-to-last dim)
_NEG_BIG = -1e30  # "minus infinity" for masked softmax (finite, avoids inf math)


def _round_up(x, m):
    return (x + m - 1) // m * m


def _mlp_logsoftmax_kernel(x_ref, w_in_ref, b_in_ref, w_hid_ref, b_hid_ref,
                           w_out_ref, b_out_ref, out_ref, *, output_size):
    """One batch tile: bf16 matmuls with f32 accumulation, f32 elementwise,
    masked (lane-padded) numerically-stable log-softmax."""
    # Input layer + ReLU.
    h = jnp.dot(x_ref[...], w_in_ref[...],
                preferred_element_type=jnp.float32) + b_in_ref[...]
    h = jnp.maximum(h, 0.0)

    # Hidden layers (num_layers is static -> unrolled Python loop).
    num_layers = w_hid_ref.shape[0]
    for i in range(num_layers):
        h = jnp.dot(h.astype(w_hid_ref.dtype), w_hid_ref[i],
                    preferred_element_type=jnp.float32) + b_hid_ref[pl.ds(i, 1), :]
        h = jnp.maximum(h, 0.0)

    # Output layer.
    logits = jnp.dot(h.astype(w_out_ref.dtype), w_out_ref[...],
                     preferred_element_type=jnp.float32) + b_out_ref[...]

    # Log-softmax over the *logical* output columns only (lane dim is padded
    # to a multiple of 128; padded lanes must not affect the normalizer).
    col = jax.lax.broadcasted_iota(jnp.int32, logits.shape, 1)
    valid = col < output_size
    logits = jnp.where(valid, logits, _NEG_BIG)
    m = jnp.max(logits, axis=-1, keepdims=True)
    shifted = logits - m
    lse = jnp.log(jnp.sum(jnp.where(valid, jnp.exp(shifted), 0.0),
                          axis=-1, keepdims=True))
    out_ref[...] = jnp.where(valid, shifted - lse, 0.0)


def graph_classifier_forward(x, params, *, block_batch=256):
    """x: (batch, input_size) f32 -> (batch, output_size) f32 log-probs."""
    input_size = params["input_size"]
    output_size = params["output_size"]
    w_in, b_in = params["w_in"], params["b_in"]
    w_hid, b_hid = params["w_hid"], params["b_hid"]
    w_out, b_out = params["w_out"], params["b_out"]

    batch = x.shape[0]
    k_pad, h_pad = w_in.shape
    o_pad = w_out.shape[1]
    num_layers = w_hid.shape[0]

    # Batch tile: multiple of 8 sublanes, 256 rows by default, padded batch.
    tb = min(block_batch, _round_up(batch, _SUBLANE))
    b_pad = _round_up(batch, tb)

    # Pad batch + input features once in the wrapper; cast x to the matmul dtype.
    xp = jnp.pad(x, ((0, b_pad - batch), (0, k_pad - input_size))).astype(w_in.dtype)

    flops = 2 * b_pad * (k_pad * h_pad + num_layers * h_pad * h_pad + h_pad * o_pad)
    bytes_accessed = int(
        xp.size * xp.dtype.itemsize
        + sum(int(p.size) * p.dtype.itemsize
              for p in (w_in, b_in, w_hid, b_hid, w_out, b_out))
        + b_pad * o_pad * 4)
    cost = pl.CostEstimate(flops=int(flops),
                           transcendentals=int(b_pad * (o_pad + 1)),
                           bytes_accessed=bytes_accessed)

    kernel = functools.partial(_mlp_logsoftmax_kernel, output_size=output_size)

    out_padded = pl.pallas_call(
        kernel,
        out_shape=jax.ShapeDtypeStruct((b_pad, o_pad), jnp.float32),
        grid=(b_pad // tb,),
        in_specs=[
            pl.BlockSpec((tb, k_pad), lambda b: (b, 0)),                # x tile
            pl.BlockSpec((k_pad, h_pad), lambda b: (0, 0)),             # w_in (resident)
            pl.BlockSpec((1, h_pad), lambda b: (0, 0)),                 # b_in
            pl.BlockSpec((num_layers, h_pad, h_pad), lambda b: (0, 0, 0)),  # w_hid
            pl.BlockSpec((num_layers, h_pad), lambda b: (0, 0)),        # b_hid
            pl.BlockSpec((h_pad, o_pad), lambda b: (0, 0)),             # w_out
            pl.BlockSpec((1, o_pad), lambda b: (0, 0)),                 # b_out
        ],
        out_specs=pl.BlockSpec((tb, o_pad), lambda b: (b, 0)),
        compiler_params=pltpu.CompilerParams(
            dimension_semantics=("parallel",),
            vmem_limit_bytes=64 * 1024 * 1024,
        ),
        cost_estimate=cost,
    )(xp, w_in, b_in, w_hid, b_hid, w_out, b_out)

    return out_padded[:batch, :output_size]


def init_params(key, input_size, hidden_size, output_size, num_layers,
                *, param_dtype=jnp.bfloat16):
    """PyTorch-Linear-style init (uniform +/- 1/sqrt(fan_in)), weights stored
    transposed to (in, out), zero-padded to 128-lane multiples, bf16 weights
    (f32 biases)."""
    k_pad = _round_up(input_size, _LANE)
    h_pad = _round_up(hidden_size, _LANE)
    o_pad = _round_up(output_size, _LANE)

    def linear(k, fan_in, fan_out, fan_in_pad, fan_out_pad):
        kw, kb = jax.random.split(k)
        bound = 1.0 / jnp.sqrt(fan_in)
        w = jax.random.uniform(kw, (fan_in, fan_out), jnp.float32, -bound, bound)
        b = jax.random.uniform(kb, (fan_out,), jnp.float32, -bound, bound)
        w = jnp.pad(w, ((0, fan_in_pad - fan_in), (0, fan_out_pad - fan_out)))
        b = jnp.pad(b, ((0, fan_out_pad - fan_out),))
        return w.astype(param_dtype), b.astype(jnp.float32)

    keys = jax.random.split(key, num_layers + 2)
    w_in, b_in = linear(keys[0], input_size, hidden_size, k_pad, h_pad)
    w_hid_list, b_hid_list = [], []
    for i in range(num_layers):
        w, b = linear(keys[1 + i], hidden_size, hidden_size, h_pad, h_pad)
        w_hid_list.append(w)
        b_hid_list.append(b)
    w_out, b_out = linear(keys[-1], hidden_size, output_size, h_pad, o_pad)

    return {
        "w_in": w_in,                          # (K_pad, H_pad)  bf16
        "b_in": b_in[None, :],                 # (1, H_pad)      f32
        "w_hid": jnp.stack(w_hid_list, 0),     # (L, H_pad, H_pad) bf16
        "b_hid": jnp.stack(b_hid_list, 0),     # (L, H_pad)      f32
        "w_out": w_out,                        # (H_pad, O_pad)  bf16
        "b_out": b_out[None, :],               # (1, O_pad)      f32
        "input_size": input_size,
        "hidden_size": hidden_size,
        "output_size": output_size,
    }


def _reference_forward(x, params):
    """Pure-JAX reference with identical padding and mixed precision."""
    input_size = params["input_size"]
    output_size = params["output_size"]
    w_in = params["w_in"]
    dtype = w_in.dtype
    k_pad = w_in.shape[0]

    xp = jnp.pad(x, ((0, 0), (0, k_pad - input_size))).astype(dtype)
    h = jnp.maximum(jnp.dot(xp, w_in, preferred_element_type=jnp.float32)
                    + params["b_in"], 0.0)
    for i in range(params["w_hid"].shape[0]):
        h = jnp.maximum(jnp.dot(h.astype(dtype), params["w_hid"][i],
                                preferred_element_type=jnp.float32)
                        + params["b_hid"][i], 0.0)
    logits = jnp.dot(h.astype(dtype), params["w_out"],
                     preferred_element_type=jnp.float32) + params["b_out"]
    logits = logits[:, :output_size]
    return jax.nn.log_softmax(logits, axis=-1)


if __name__ == "__main__":
    # Small shapes consistent with the module's forward.
    batch, input_size, hidden_size, output_size, num_layers = 8, 16, 32, 4, 2

    key = jax.random.PRNGKey(0)
    k_x, k_p = jax.random.split(key)
    x = jax.random.normal(k_x, (batch, input_size), jnp.float32)
    params = init_params(k_p, input_size, hidden_size, output_size, num_layers)

    out = graph_classifier_forward(x, params)
    out = jax.block_until_ready(out)

    ref = _reference_forward(x, params)
    assert out.shape == (batch, output_size)
    # bf16 matmul operands (f32 accumulation) -> compare vs matching-precision ref.
    assert jnp.allclose(out, ref, atol=2e-3, rtol=2e-3), "mismatch vs reference"

    print("KERNEL_OK")
</pallas_src>

<mosaic_0001>
module attributes {stable_mosaic.version = 11 : i64} {
  func.func @_mlp_logsoftmax_kernel(%arg0: i32, %arg1: memref<8x128xbf16, #tpu.memory_space<vmem>>, %arg2: memref<128x128xbf16, #tpu.memory_space<vmem>>, %arg3: memref<1x128xf32, #tpu.memory_space<vmem>>, %arg4: memref<2x128x128xbf16, #tpu.memory_space<vmem>>, %arg5: memref<2x128xf32, #tpu.memory_space<vmem>>, %arg6: memref<128x128xbf16, #tpu.memory_space<vmem>>, %arg7: memref<1x128xf32, #tpu.memory_space<vmem>>, %arg8: memref<8x128xf32, #tpu.memory_space<vmem>>) attributes {dimension_semantics = [#tpu.dimension_semantics<parallel>], iteration_bounds = array<i64: 1>, scalar_prefetch = 0 : i64, scratch_operands = 0 : i64, tpu.core_type = #tpu.core_type<tc>, window_params = [{transform_indices = @transform_0, window_bounds = array<i64: 8, 128>}, {pipeline_mode = #tpu.pipeline_mode<synchronous>, transform_indices = @transform_1, window_bounds = array<i64: 128, 128>}, {pipeline_mode = #tpu.pipeline_mode<synchronous>, transform_indices = @transform_2, window_bounds = array<i64: 1, 128>}, {pipeline_mode = #tpu.pipeline_mode<synchronous>, transform_indices = @transform_3, window_bounds = array<i64: 2, 128, 128>}, {pipeline_mode = #tpu.pipeline_mode<synchronous>, transform_indices = @transform_4, window_bounds = array<i64: 2, 128>}, {pipeline_mode = #tpu.pipeline_mode<synchronous>, transform_indices = @transform_5, window_bounds = array<i64: 128, 128>}, {pipeline_mode = #tpu.pipeline_mode<synchronous>, transform_indices = @transform_6, window_bounds = array<i64: 1, 128>}, {transform_indices = @transform_7, window_bounds = array<i64: 8, 128>}]} {
    %c0 = arith.constant 0 : index
    %c0_0 = arith.constant 0 : index
    %0 = vector.load %arg1[%c0, %c0_0] : memref<8x128xbf16, #tpu.memory_space<vmem>>, vector<8x128xbf16>
    %c0_1 = arith.constant 0 : index
    %c0_2 = arith.constant 0 : index
    %1 = vector.load %arg2[%c0_1, %c0_2] : memref<128x128xbf16, #tpu.memory_space<vmem>>, vector<128x128xbf16>
    %cst = arith.constant dense<0.000000e+00> : vector<8x128xf32>
    %2 = tpu.matmul %0, %1, %cst {dimension_numbers = #tpu.dot_dimension_numbers<[1], [0], [0], [1], [0, 0, 1, 1], [], []>} : vector<8x128xbf16>, vector<128x128xbf16>, vector<8x128xf32> -> vector<8x128xf32>
    %c0_3 = arith.constant 0 : index
    %c0_4 = arith.constant 0 : index
    %3 = vector.load %arg3[%c0_3, %c0_4] : memref<1x128xf32, #tpu.memory_space<vmem>>, vector<1x128xf32>
    %4 = vector.broadcast %3 : vector<1x128xf32> to vector<8x128xf32>
    %5 = arith.addf %2, %4 : vector<8x128xf32>
    %cst_5 = arith.constant 0.000000e+00 : f32
    %6 = vector.broadcast %cst_5 : f32 to vector<8x128xf32>
    %7 = arith.maximumf %5, %6 : vector<8x128xf32>
    %8 = arith.truncf %7 : vector<8x128xf32> to vector<8x128xbf16>
    %c0_6 = arith.constant 0 : index
    %c0_7 = arith.constant 0 : index
    %c0_8 = arith.constant 0 : index
    %9 = vector.load %arg4[%c0_6, %c0_7, %c0_8] : memref<2x128x128xbf16, #tpu.memory_space<vmem>>, vector<1x128x128xbf16>
    %10 = vector.shape_cast %9 : vector<1x128x128xbf16> to vector<128x128xbf16>
    %cst_9 = arith.constant dense<0.000000e+00> : vector<8x128xf32>
    %11 = tpu.matmul %8, %10, %cst_9 {dimension_numbers = #tpu.dot_dimension_numbers<[1], [0], [0], [1], [0, 0, 1, 1], [], []>} : vector<8x128xbf16>, vector<128x128xbf16>, vector<8x128xf32> -> vector<8x128xf32>
    %c0_10 = arith.constant 0 : index
    %c0_11 = arith.constant 0 : index
    %12 = vector.load %arg5[%c0_10, %c0_11] : memref<2x128xf32, #tpu.memory_space<vmem>>, vector<1x128xf32>
    %13 = vector.broadcast %12 : vector<1x128xf32> to vector<8x128xf32>
    %14 = arith.addf %11, %13 : vector<8x128xf32>
    %cst_12 = arith.constant 0.000000e+00 : f32
    %15 = vector.broadcast %cst_12 : f32 to vector<8x128xf32>
    %16 = arith.maximumf %14, %15 : vector<8x128xf32>
    %17 = arith.truncf %16 : vector<8x128xf32> to vector<8x128xbf16>
    %c1 = arith.constant 1 : index
    %c0_13 = arith.constant 0 : index
    %c0_14 = arith.constant 0 : index
    %18 = vector.load %arg4[%c1, %c0_13, %c0_14] : memref<2x128x128xbf16, #tpu.memory_space<vmem>>, vector<1x128x128xbf16>
    %19 = vector.shape_cast %18 : vector<1x128x128xbf16> to vector<128x128xbf16>
    %cst_15 = arith.constant dense<0.000000e+00> : vector<8x128xf32>
    %20 = tpu.matmul %17, %19, %cst_15 {dimension_numbers = #tpu.dot_dimension_numbers<[1], [0], [0], [1], [0, 0, 1, 1], [], []>} : vector<8x128xbf16>, vector<128x128xbf16>, vector<8x128xf32> -> vector<8x128xf32>
    %c1_16 = arith.constant 1 : index
    %c0_17 = arith.constant 0 : index
    %21 = vector.load %arg5[%c1_16, %c0_17] : memref<2x128xf32, #tpu.memory_space<vmem>>, vector<1x128xf32>
    %22 = vector.broadcast %21 : vector<1x128xf32> to vector<8x128xf32>
    %23 = arith.addf %20, %22 : vector<8x128xf32>
    %cst_18 = arith.constant 0.000000e+00 : f32
    %24 = vector.broadcast %cst_18 : f32 to vector<8x128xf32>
    %25 = arith.maximumf %23, %24 : vector<8x128xf32>
    %26 = arith.truncf %25 : vector<8x128xf32> to vector<8x128xbf16>
    %c0_19 = arith.constant 0 : index
    %c0_20 = arith.constant 0 : index
    %27 = vector.load %arg6[%c0_19, %c0_20] : memref<128x128xbf16, #tpu.memory_space<vmem>>, vector<128x128xbf16>
    %cst_21 = arith.constant dense<0.000000e+00> : vector<8x128xf32>
    %28 = tpu.matmul %26, %27, %cst_21 {dimension_numbers = #tpu.dot_dimension_numbers<[1], [0], [0], [1], [0, 0, 1, 1], [], []>} : vector<8x128xbf16>, vector<128x128xbf16>, vector<8x128xf32> -> vector<8x128xf32>
    %c0_22 = arith.constant 0 : index
    %c0_23 = arith.constant 0 : index
    %29 = vector.load %arg7[%c0_22, %c0_23] : memref<1x128xf32, #tpu.memory_space<vmem>>, vector<1x128xf32>
    %30 = vector.broadcast %29 : vector<1x128xf32> to vector<8x128xf32>
    %31 = arith.addf %28, %30 : vector<8x128xf32>
    %32 = tpu.iota {dimensions = array<i32: 1>} : vector<8x128xi32>
    %c4_i32 = arith.constant 4 : i32
    %33 = vector.broadcast %c4_i32 : i32 to vector<8x128xi32>
    %34 = arith.cmpi slt, %32, %33 : vector<8x128xi32>
    %cst_24 = arith.constant -1.000000e+30 : f32
    %35 = vector.broadcast %cst_24 : f32 to vector<8x128xf32>
    %36 = arith.select %34, %31, %35 : vector<8x128xi1>, vector<8x128xf32>
    %cst_25 = arith.constant dense<0xFF800000> : vector<8xf32>
    %37 = vector.multi_reduction <maximumf>, %36, %cst_25 [1] : vector<8x128xf32> to vector<8xf32>
    %38 = vector.shape_cast %37 : vector<8xf32> to vector<8x1xf32>
    %39 = vector.broadcast %38 : vector<8x1xf32> to vector<8x128xf32>
    %40 = arith.subf %36, %39 : vector<8x128xf32>
    %41 = math.exp %40 : vector<8x128xf32>
    %cst_26 = arith.constant 0.000000e+00 : f32
    %42 = vector.broadcast %cst_26 : f32 to vector<8x128xf32>
    %43 = arith.select %34, %41, %42 : vector<8x128xi1>, vector<8x128xf32>
    %cst_27 = arith.constant dense<0.000000e+00> : vector<8xf32>
    %44 = vector.multi_reduction <add>, %43, %cst_27 [1] : vector<8x128xf32> to vector<8xf32>
    %45 = vector.shape_cast %44 : vector<8xf32> to vector<8x1xf32>
    %46 = math.log %45 : vector<8x1xf32>
    %47 = vector.broadcast %46 : vector<8x1xf32> to vector<8x128xf32>
    %48 = arith.subf %40, %47 : vector<8x128xf32>
    %cst_28 = arith.constant 0.000000e+00 : f32
    %49 = vector.broadcast %cst_28 : f32 to vector<8x128xf32>
    %50 = arith.select %34, %48, %49 : vector<8x128xi1>, vector<8x128xf32>
    %c0_29 = arith.constant 0 : index
    %c0_30 = arith.constant 0 : index
    %51 = vector.load %arg8[%c0_29, %c0_30] : memref<8x128xf32, #tpu.memory_space<vmem>>, vector<8x128xf32>
    tpu.vector_store %arg8[%c0_29, %c0_30], %50 {strides = array<i32>} : memref<8x128xf32, #tpu.memory_space<vmem>>, vector<8x128xf32>,
    return
  }
  func.func @transform_0(%arg0: i32) -> (i32, i32) {
    %c0_i32 = arith.constant 0 : i32
    %c0_i32_0 = arith.constant 0 : i32
    return %arg0, %c0_i32 : i32, i32
  }
  func.func @transform_1(%arg0: i32) -> (i32, i32) {
    %c0_i32 = arith.constant 0 : i32
    %c0_i32_0 = arith.constant 0 : i32
    %c0_i32_1 = arith.constant 0 : i32
    return %c0_i32, %c0_i32_0 : i32, i32
  }
  func.func @transform_2(%arg0: i32) -> (i32, i32) {
    %c0_i32 = arith.constant 0 : i32
    %c0_i32_0 = arith.constant 0 : i32
    %c0_i32_1 = arith.constant 0 : i32
    return %c0_i32, %c0_i32_0 : i32, i32
  }
  func.func @transform_3(%arg0: i32) -> (i32, i32, i32) {
    %c0_i32 = arith.constant 0 : i32
    %c0_i32_0 = arith.constant 0 : i32
    %c0_i32_1 = arith.constant 0 : i32
    %c0_i32_2 = arith.constant 0 : i32
    return %c0_i32, %c0_i32_0, %c0_i32_1 : i32, i32, i32
  }
  func.func @transform_4(%arg0: i32) -> (i32, i32) {
    %c0_i32 = arith.constant 0 : i32
    %c0_i32_0 = arith.constant 0 : i32
    %c0_i32_1 = arith.constant 0 : i32
    return %c0_i32, %c0_i32_0 : i32, i32
  }
  func.func @transform_5(%arg0: i32) -> (i32, i32) {
    %c0_i32 = arith.constant 0 : i32
    %c0_i32_0 = arith.constant 0 : i32
    %c0_i32_1 = arith.constant 0 : i32
    return %c0_i32, %c0_i32_0 : i32, i32
  }
  func.func @transform_6(%arg0: i32) -> (i32, i32) {
    %c0_i32 = arith.constant 0 : i32
    %c0_i32_0 = arith.constant 0 : i32
    %c0_i32_1 = arith.constant 0 : i32
    return %c0_i32, %c0_i32_0 : i32, i32
  }
  func.func @transform_7(%arg0: i32) -> (i32, i32) {
    %c0_i32 = arith.constant 0 : i32
    %c0_i32_0 = arith.constant 0 : i32
    return %arg0, %c0_i32 : i32, i32
  }
}

</mosaic_0001>

<llo_original>
// kernel: tpu_custom_call.1
$region0: #{tpu_custom_call.1}
  #allocation0 [shape = 'u32[]', space=smem, size = 0x4, offset = 0x4, fixed_abs, tag = 'smem constant byte address 0x4 - core index']
  #allocation1 [shape = 'u32[72,128]{1,0:T(1,128)}', space=vmem, size = 0x9000, scoped, tag = 'internal scratch']
  %s0 = inlined_call_operand.hbm [shape: bf16[8,128], index: 0, kind: input, shape index: {}]
  %s1 = inlined_call_operand.hbm [shape: bf16[128,128], index: 1, kind: input, shape index: {}]
  %s2 = inlined_call_operand.vmem [shape: f32[1,128], index: 2, kind: input, shape index: {}]
  %s3 = inlined_call_operand.hbm [shape: bf16[2,128,128], index: 3, kind: input, shape index: {}]
  %s4 = inlined_call_operand.vmem [shape: f32[2,128], index: 4, kind: input, shape index: {}]
  %s5 = inlined_call_operand.hbm [shape: bf16[128,128], index: 5, kind: input, shape index: {}]
  %s6 = inlined_call_operand.vmem [shape: f32[1,128], index: 6, kind: input, shape index: {}]
  %s7 = inlined_call_operand.hbm [shape: f32[8,128], index: 7, kind: output, shape index: {}]
  %s8 = sld [smem:[#allocation0]]
  $region54: #{tpu_custom_call.1} parent=0
    _
  %s10 = ssub.s32 1, %s8
  %s11 = scalar_select 0, %s10, %s8
  $region1: #{tpu_custom_call.1} parent=0
    #allocation2 [shape = 'u8[2048]{0}', space=vmem, size = 0x800, scoped, tag = 'input window, operand 0, single buffered']
    #allocation3 [shape = 's32[1]{0}', space=sflag, size = 0x4, scoped, tag = 'scoped memory for tpu_custom_call.1']
    #allocation4 [shape = 's32[1]{0}', space=sflag, size = 0x4, scoped, tag = 'scoped memory for tpu_custom_call.1']
    #allocation5 [shape = 'u8[32768]{0}', space=vmem, size = 0x8000, scoped, tag = 'input window, operand 1, single buffered']
    #allocation6 [shape = 's32[1]{0}', space=sflag, size = 0x4, scoped, tag = 'scoped memory for tpu_custom_call.1']
    #allocation7 [shape = 'u8[65536]{0}', space=vmem, size = 0x10000, scoped, tag = 'input window, operand 3, single buffered']
    #allocation8 [shape = 'u8[32768]{0}', space=vmem, size = 0x8000, scoped, tag = 'input window, operand 5, single buffered']
    #allocation9 [shape = 's32[1]{0}', space=sflag, size = 0x4, scoped, tag = 'scoped memory for tpu_custom_call.1']
    #allocation10 [shape = 'u8[4096]{0}', space=vmem, size = 0x1000, scoped, tag = 'output window, operand 0, single buffered']
    %12 = vsyncpa [#allocation3], 0
    %13 = vsyncpa [#allocation6], 0
    %14 = vsyncpa [#allocation9], 0
    %15 = vsyncpa [#allocation4], 0
    // Predicated region
    $region2: #{tpu_custom_call.1} parent=1 // pred_check
      _
    $region3: #{tpu_custom_call.1} parent=1 // pred_check_branch
      %17 = sbr.rel (0) target = $region5
    $region4: #{tpu_custom_call.1} parent=1 // pred_region
      %19 = vsyncadd [#allocation3], 0
      %s21 = sshll.u32 %s0, 4
      %s22 = int_to_ptr.hbm [resolvable:$true] %s21
      %s23 = sshll.u32 [#allocation2], 4
      %s24 = int_to_ptr.vmem [resolvable:$true] %s23
      %26 = dma.hbm_to_vmem [thread:$0]  %s22, 64, %s24, [#allocation3]
    $region5: #{tpu_custom_call.1} parent=1 // pred_fallthru
      _
    // Predicated region
    $region6: #{tpu_custom_call.1} parent=1 // pred_check
      _
    $region7: #{tpu_custom_call.1} parent=1 // pred_check_branch
      %28 = sbr.rel (0) target = $region9
    $region8: #{tpu_custom_call.1} parent=1 // pred_region
      %30 = vsyncadd [#allocation6], 0
      %s31 = sshll.u32 %s1, 4
      %s32 = int_to_ptr.hbm [resolvable:$true] %s31
      %s33 = sshll.u32 [#allocation5], 4
      %s34 = int_to_ptr.vmem [resolvable:$true] %s33
      %39 = dma.hbm_to_vmem [thread:$0]  %s32, 1024, %s34, [#allocation6], 64, 64, 4
    $region9: #{tpu_custom_call.1} parent=1 // pred_fallthru
      _
    // Predicated region
    $region10: #{tpu_custom_call.1} parent=1 // pred_check
      _
    $region11: #{tpu_custom_call.1} parent=1 // pred_check_branch
      %41 = sbr.rel (0) target = $region13
    $region12: #{tpu_custom_call.1} parent=1 // pred_region
      _
    $region13: #{tpu_custom_call.1} parent=1 // pred_fallthru
      _
    // Predicated region
    $region14: #{tpu_custom_call.1} parent=1 // pred_check
      _
    $region15: #{tpu_custom_call.1} parent=1 // pred_check_branch
      %43 = sbr.rel (0) target = $region17
    $region16: #{tpu_custom_call.1} parent=1 // pred_region
      %45 = vsyncadd [#allocation6], 0
      %s46 = sshll.u32 %s3, 4
      %s47 = int_to_ptr.hbm [resolvable:$true] %s46
      %s48 = sshll.u32 [#allocation7], 4
      %s49 = int_to_ptr.vmem [resolvable:$true] %s48
      %54 = dma.hbm_to_vmem [thread:$0]  %s47, 2048, %s49, [#allocation6], 64, 64, 4
    $region17: #{tpu_custom_call.1} parent=1 // pred_fallthru
      _
    // Predicated region
    $region18: #{tpu_custom_call.1} parent=1 // pred_check
      _
    $region19: #{tpu_custom_call.1} parent=1 // pred_check_branch
      %56 = sbr.rel (0) target = $region21
    $region20: #{tpu_custom_call.1} parent=1 // pred_region
      _
    $region21: #{tpu_custom_call.1} parent=1 // pred_fallthru
      _
    // Predicated region
    $region22: #{tpu_custom_call.1} parent=1 // pred_check
      _
    $region23: #{tpu_custom_call.1} parent=1 // pred_check_branch
      %58 = sbr.rel (0) target = $region25
    $region24: #{tpu_custom_call.1} parent=1 // pred_region
      %60 = vsyncadd [#allocation9], 0
      %s61 = sshll.u32 %s5, 4
      %s62 = int_to_ptr.hbm [resolvable:$true] %s61
      %s63 = sshll.u32 [#allocation8], 4
      %s64 = int_to_ptr.vmem [resolvable:$true] %s63
      %69 = dma.hbm_to_vmem [thread:$0]  %s62, 1024, %s64, [#allocation9], 64, 64, 4
    $region25: #{tpu_custom_call.1} parent=1 // pred_fallthru
      _
    // Predicated region
    $region26: #{tpu_custom_call.1} parent=1 // pred_check
      _
    $region27: #{tpu_custom_call.1} parent=1 // pred_check_branch
      %71 = sbr.rel (0) target = $region29
    $region28: #{tpu_custom_call.1} parent=1 // pred_region
      _
    $region29: #{tpu_custom_call.1} parent=1 // pred_fallthru
      _
    // Predicated region
    $region30: #{tpu_custom_call.1} parent=1 // pred_check
      _
    $region31: #{tpu_custom_call.1} parent=1 // pred_check_branch
      %73 = sbr.rel (0) target = $region33
    $region32: #{tpu_custom_call.1} parent=1 // pred_region
      %75 = dma.done [#allocation3], 64
    $region33: #{tpu_custom_call.1} parent=1 // pred_fallthru
      _
    // Predicated region
    $region34: #{tpu_custom_call.1} parent=1 // pred_check
      _
    $region35: #{tpu_custom_call.1} parent=1 // pred_check_branch
      %77 = sbr.rel (0) target = $region37
    $region36: #{tpu_custom_call.1} parent=1 // pred_region
      %79 = dma.done [#allocation6], 1024
    $region37: #{tpu_custom_call.1} parent=1 // pred_fallthru
      _
    // Predicated region
    $region38: #{tpu_custom_call.1} parent=1 // pred_check
      _
    $region39: #{tpu_custom_call.1} parent=1 // pred_check_branch
      %81 = sbr.rel (0) target = $region41
    $region40: #{tpu_custom_call.1} parent=1 // pred_region
      %83 = dma.done [#allocation6], 2048
    $region41: #{tpu_custom_call.1} parent=1 // pred_fallthru
      _
    // Predicated region
    $region42: #{tpu_custom_call.1} parent=1 // pred_check
      _
    $region43: #{tpu_custom_call.1} parent=1 // pred_check_branch
      %85 = sbr.rel (0) target = $region45
    $region44: #{tpu_custom_call.1} parent=1 // pred_region
      %87 = dma.done [#allocation9], 1024
    $region45: #{tpu_custom_call.1} parent=1 // pred_fallthru
      _
    %v88 = vld [vmem:[#allocation2] sm:$0xf]
    %v89 = vld [vmem:[#allocation5] sm:$0xf]
    %v90 = vld [vmem:[#allocation5 + $0x4] sm:$0xf]
    %v91 = vld [vmem:[#allocation5 + $0x8] sm:$0xf]
    %v92 = vld [vmem:[#allocation5 + $0xc] sm:$0xf]
    %v93 = vld [vmem:[#allocation5 + $0x10] sm:$0xf]
    %v94 = vld [vmem:[#allocation5 + $0x14] sm:$0xf]
    %v95 = vld [vmem:[#allocation5 + $0x18] sm:$0xf]
    %v96 = vld [vmem:[#allocation5 + $0x1c] sm:$0xf]
    %v97 = vld [vmem:[#allocation5 + $0x20] sm:$0xf]
    %v98 = vld [vmem:[#allocation5 + $0x24] sm:$0xf]
    %v99 = vld [vmem:[#allocation5 + $0x28] sm:$0xf]
    %v100 = vld [vmem:[#allocation5 + $0x2c] sm:$0xf]
    %v101 = vld [vmem:[#allocation5 + $0x30] sm:$0xf]
    %v102 = vld [vmem:[#allocation5 + $0x34] sm:$0xf]
    %v103 = vld [vmem:[#allocation5 + $0x38] sm:$0xf]
    %v104 = vld [vmem:[#allocation5 + $0x3c] sm:$0xf]
    %v105 = vld [vmem:[%s2] sm:$0x1]
    %v107 = vperm.slane %v105, 0
    %v125 = vunpack.c.l.b16 %v89
    %v126 = vunpack.c.l.b16 %v90
    %v127 = vunpack.c.l.b16 %v91
    %v128 = vunpack.c.l.b16 %v92
    %v129 = vunpack.c.l.b16 %v93
    %v130 = vunpack.c.l.b16 %v94
    %v131 = vunpack.c.l.b16 %v95
    %v132 = vunpack.c.l.b16 %v96
    %v133 = vunpack.c.l.b16 %v97
    %v134 = vunpack.c.l.b16 %v98
    %v135 = vunpack.c.l.b16 %v99
    %v136 = vunpack.c.l.b16 %v100
    %v137 = vunpack.c.l.b16 %v101
    %v138 = vunpack.c.l.b16 %v102
    %v139 = vunpack.c.l.b16 %v103
    %v140 = vunpack.c.l.b16 %v104
    %v141 = vpack.c.b16 %v126, %v125
    %v142 = vpack.c.b16 %v128, %v127
    %v143 = vpack.c.b16 %v130, %v129
    %v144 = vpack.c.b16 %v132, %v131
    %v145 = vpack.c.b16 %v134, %v133
    %v146 = vpack.c.b16 %v136, %v135
    %v147 = vpack.c.b16 %v138, %v137
    %v148 = vpack.c.b16 %v140, %v139
    %157 = vmatpush.bf16.msra.mxu0 %v148
    %158 = vmatpush.bf16.msra.mxu0 %v147
    %159 = vmatpush.bf16.msra.mxu0 %v146
    %160 = vmatpush.bf16.msra.mxu0 %v145
    %161 = vmatpush.bf16.msra.mxu0 %v144
    %162 = vmatpush.bf16.msra.mxu0 %v143
    %163 = vmatpush.bf16.msra.mxu0 %v142
    %164 = vmatpush.bf16.msra.mxu0 %v141
    %165 = vmatmul.bf16.gmra.mxu0 %v88
    %v166 = vpop.f32.mrf.mxu0
    %v167 = vadd.f32 %v107, %v166
    %v168 = vpop.f32.mrf.mxu0
    %169 = vdwg.mxu0
    %v170 = vmax.f32 %v167, 0.0
    %v171 = vpack.c.bf16 %v170, %v170
    %v172 = vld [vmem:[#allocation7] sm:$0xf]
    %v173 = vld [vmem:[#allocation7 + $0x4] sm:$0xf]
    %v174 = vld [vmem:[#allocation7 + $0x8] sm:$0xf]
    %v175 = vld [vmem:[#allocation7 + $0xc] sm:$0xf]
    %v176 = vld [vmem:[#allocation7 + $0x10] sm:$0xf]
    %v177 = vld [vmem:[#allocation7 + $0x14] sm:$0xf]
    %v178 = vld [vmem:[#allocation7 + $0x18] sm:$0xf]
    %v179 = vld [vmem:[#allocation7 + $0x1c] sm:$0xf]
    %v180 = vld [vmem:[#allocation7 + $0x20] sm:$0xf]
    %v181 = vld [vmem:[#allocation7 + $0x24] sm:$0xf]
    %v182 = vld [vmem:[#allocation7 + $0x28] sm:$0xf]
    %v183 = vld [vmem:[#allocation7 + $0x2c] sm:$0xf]
    %v184 = vld [vmem:[#allocation7 + $0x30] sm:$0xf]
    %v185 = vld [vmem:[#allocation7 + $0x34] sm:$0xf]
    %v186 = vld [vmem:[#allocation7 + $0x38] sm:$0xf]
    %v187 = vld [vmem:[#allocation7 + $0x3c] sm:$0xf]
    %v188 = vld [vmem:[%s4] sm:$0x1]
    %v189 = vperm.slane %v188, 0
    %v206 = vunpack.c.l.b16 %v172
    %v207 = vunpack.c.l.b16 %v173
    %v208 = vunpack.c.l.b16 %v174
    %v209 = vunpack.c.l.b16 %v175
    %v210 = vunpack.c.l.b16 %v176
    %v211 = vunpack.c.l.b16 %v177
    %v212 = vunpack.c.l.b16 %v178
    %v213 = vunpack.c.l.b16 %v179
    %v214 = vunpack.c.l.b16 %v180
    %v215 = vunpack.c.l.b16 %v181
    %v216 = vunpack.c.l.b16 %v182
    %v217 = vunpack.c.l.b16 %v183
    %v218 = vunpack.c.l.b16 %v184
    %v219 = vunpack.c.l.b16 %v185
    %v220 = vunpack.c.l.b16 %v186
    %v221 = vunpack.c.l.b16 %v187
    %v222 = vpack.c.b16 %v207, %v206
    %v223 = vpack.c.b16 %v209, %v208
    %v224 = vpack.c.b16 %v211, %v210
    %v225 = vpack.c.b16 %v213, %v212
    %v226 = vpack.c.b16 %v215, %v214
    %v227 = vpack.c.b16 %v217, %v216
    %v228 = vpack.c.b16 %v219, %v218
    %v229 = vpack.c.b16 %v221, %v220
    %238 = vmatpush.bf16.msra.mxu0 %v229
    %239 = vmatpush.bf16.msra.mxu0 %v228
    %240 = vmatpush.bf16.msra.mxu0 %v227
    %241 = vmatpush.bf16.msra.mxu0 %v226
    %242 = vmatpush.bf16.msra.mxu0 %v225
    %243 = vmatpush.bf16.msra.mxu0 %v224
    %244 = vmatpush.bf16.msra.mxu0 %v223
    %245 = vmatpush.bf16.msra.mxu0 %v222
    %246 = vmatmul.bf16.gmra.mxu0 %v171
    %v247 = vpop.f32.mrf.mxu0
    %v248 = vadd.f32 %v189, %v247
    %v249 = vpop.f32.mrf.mxu0
    %250 = vdwg.mxu0
    %v251 = vmax.f32 %v248, 0.0
    %v252 = vpack.c.bf16 %v251, %v251
    %s253 = scalar_lea.vmem [#allocation7], 64
    %v254 = vld [vmem:[%s253] sm:$0xf]
    %v255 = vld [vmem:[%s253 + $0x4] sm:$0xf]
    %v256 = vld [vmem:[%s253 + $0x8] sm:$0xf]
    %v257 = vld [vmem:[%s253 + $0xc] sm:$0xf]
    %v258 = vld [vmem:[%s253 + $0x10] sm:$0xf]
    %v259 = vld [vmem:[%s253 + $0x14] sm:$0xf]
    %v260 = vld [vmem:[%s253 + $0x18] sm:$0xf]
    %v261 = vld [vmem:[%s253 + $0x1c] sm:$0xf]
    %v262 = vld [vmem:[%s253 + $0x20] sm:$0xf]
    %v263 = vld [vmem:[%s253 + $0x24] sm:$0xf]
    %v264 = vld [vmem:[%s253 + $0x28] sm:$0xf]
    %v265 = vld [vmem:[%s253 + $0x2c] sm:$0xf]
    %v266 = vld [vmem:[%s253 + $0x30] sm:$0xf]
    %v267 = vld [vmem:[%s253 + $0x34] sm:$0xf]
    %v268 = vld [vmem:[%s253 + $0x38] sm:$0xf]
    %v269 = vld [vmem:[%s253 + $0x3c] sm:$0xf]
    %v270 = vld [vmem:[%s4 + $0x1] sm:$0x1]
    %v271 = vperm.slane %v270, 0
    %v288 = vunpack.c.l.b16 %v254
    %v289 = vunpack.c.l.b16 %v255
    %v290 = vunpack.c.l.b16 %v256
    %v291 = vunpack.c.l.b16 %v257
    %v292 = vunpack.c.l.b16 %v258
    %v293 = vunpack.c.l.b16 %v259
    %v294 = vunpack.c.l.b16 %v260
    %v295 = vunpack.c.l.b16 %v261
    %v296 = vunpack.c.l.b16 %v262
    %v297 = vunpack.c.l.b16 %v263
    %v298 = vunpack.c.l.b16 %v264
    %v299 = vunpack.c.l.b16 %v265
    %v300 = vunpack.c.l.b16 %v266
    %v301 = vunpack.c.l.b16 %v267
    %v302 = vunpack.c.l.b16 %v268
    %v303 = vunpack.c.l.b16 %v269
    %v304 = vpack.c.b16 %v289, %v288
    %v305 = vpack.c.b16 %v291, %v290
    %v306 = vpack.c.b16 %v293, %v292
    %v307 = vpack.c.b16 %v295, %v294
    %v308 = vpack.c.b16 %v297, %v296
    %v309 = vpack.c.b16 %v299, %v298
    %v310 = vpack.c.b16 %v301, %v300
    %v311 = vpack.c.b16 %v303, %v302
    %320 = vmatpush.bf16.msra.mxu0 %v311
    %321 = vmatpush.bf16.msra.mxu0 %v310
    %322 = vmatpush.bf16.msra.mxu0 %v309
    %323 = vmatpush.bf16.msra.mxu0 %v308
    %324 = vmatpush.bf16.msra.mxu0 %v307
    %325 = vmatpush.bf16.msra.mxu0 %v306
    %326 = vmatpush.bf16.msra.mxu0 %v305
    %327 = vmatpush.bf16.msra.mxu0 %v304
    %328 = vmatmul.bf16.gmra.mxu0 %v252
    %v329 = vpop.f32.mrf.mxu0
    %v330 = vadd.f32 %v271, %v329
    %v331 = vpop.f32.mrf.mxu0
    %332 = vdwg.mxu0
    %v333 = vmax.f32 %v330, 0.0
    %v334 = vpack.c.bf16 %v333, %v333
    %v335 = vld [vmem:[#allocation8] sm:$0xf]
    %v336 = vld [vmem:[#allocation8 + $0x4] sm:$0xf]
    %v337 = vld [vmem:[#allocation8 + $0x8] sm:$0xf]
    %v338 = vld [vmem:[#allocation8 + $0xc] sm:$0xf]
    %v339 = vld [vmem:[#allocation8 + $0x10] sm:$0xf]
    %v340 = vld [vmem:[#allocation8 + $0x14] sm:$0xf]
    %v341 = vld [vmem:[#allocation8 + $0x18] sm:$0xf]
    %v342 = vld [vmem:[#allocation8 + $0x1c] sm:$0xf]
    %v343 = vld [vmem:[#allocation8 + $0x20] sm:$0xf]
    %v344 = vld [vmem:[#allocation8 + $0x24] sm:$0xf]
    %v345 = vld [vmem:[#allocation8 + $0x28] sm:$0xf]
    %v346 = vld [vmem:[#allocation8 + $0x2c] sm:$0xf]
    %v347 = vld [vmem:[#allocation8 + $0x30] sm:$0xf]
    %v348 = vld [vmem:[#allocation8 + $0x34] sm:$0xf]
    %v349 = vld [vmem:[#allocation8 + $0x38] sm:$0xf]
    %v350 = vld [vmem:[#allocation8 + $0x3c] sm:$0xf]
    %v351 = vld [vmem:[%s6] sm:$0x1]
    %v353 = vperm.slane %v351, 0
    %v371 = vunpack.c.l.b16 %v335
    %v372 = vunpack.c.l.b16 %v336
    %v373 = vunpack.c.l.b16 %v337
    %v374 = vunpack.c.l.b16 %v338
    %v375 = vunpack.c.l.b16 %v339
    %v376 = vunpack.c.l.b16 %v340
    %v377 = vunpack.c.l.b16 %v341
    %v378 = vunpack.c.l.b16 %v342
    %v379 = vunpack.c.l.b16 %v343
    %v380 = vunpack.c.l.b16 %v344
    %v381 = vunpack.c.l.b16 %v345
    %v382 = vunpack.c.l.b16 %v346
    %v383 = vunpack.c.l.b16 %v347
    %v384 = vunpack.c.l.b16 %v348
    %v385 = vunpack.c.l.b16 %v349
    %v386 = vunpack.c.l.b16 %v350
    %v387 = vpack.c.b16 %v372, %v371
    %v388 = vpack.c.b16 %v374, %v373
    %v389 = vpack.c.b16 %v376, %v375
    %v390 = vpack.c.b16 %v378, %v377
    %v391 = vpack.c.b16 %v380, %v379
    %v392 = vpack.c.b16 %v382, %v381
    %v393 = vpack.c.b16 %v384, %v383
    %v394 = vpack.c.b16 %v386, %v385
    %403 = vmatpush.bf16.msra.mxu0 %v394
    %404 = vmatpush.bf16.msra.mxu0 %v393
    %405 = vmatpush.bf16.msra.mxu0 %v392
    %406 = vmatpush.bf16.msra.mxu0 %v391
    %407 = vmatpush.bf16.msra.mxu0 %v390
    %408 = vmatpush.bf16.msra.mxu0 %v389
    %409 = vmatpush.bf16.msra.mxu0 %v388
    %410 = vmatpush.bf16.msra.mxu0 %v387
    %411 = vmatmul.bf16.gmra.mxu0 %v334
    %v412 = vpop.f32.mrf.mxu0
    %v413 = vadd.f32 %v353, %v412
    %v414 = vpop.f32.mrf.mxu0
    %415 = vdwg.mxu0
    %v416 = vlaneseq
    %v417 = vand.u32 %v416, 127
    %vm418 = vcmp.lt.s32.totalorder %v417, 4
    %v419 = vsel %vm418, %v413, -1e+30
    %420 = vmax.xlane.f32.xlu0 %v419
    %v421 = vpop.xlane.xlu0 %420
    %v422 = vsub.f32 %v419, %v421
    %v423 = vmul.f32 %v422, 1.442695
    %v424 = vpow.pop %v423
    %v425 = vsel %vm418, %v424, 0.0
    %426 = vadd.xlane.f32.xlu0 %v425
    %v427 = vpop.xlane.xlu0 %426
    %v428 = vlog2.pop %v427
    %v429 = vmul.f32 %v428, 0.6931472
    %v430 = vsub.f32 %v422, %v429
    %v431 = vsel %vm418, %v430, 0.0
    %432 = vst [vmem:[#allocation10] sm:$0xff] %v431
    // Predicated region
    $region46: #{tpu_custom_call.1} parent=1 // pred_check
      _
    $region47: #{tpu_custom_call.1} parent=1 // pred_check_branch
      %434 = sbr.rel (0) target = $region49
    $region48: #{tpu_custom_call.1} parent=1 // pred_region
      %436 = vsyncadd [#allocation4], 0
      %s438 = sshll.u32 [#allocation10], 4
      %s439 = int_to_ptr.vmem [resolvable:$true] %s438
      %s440 = sshll.u32 %s7, 4
      %s441 = int_to_ptr.hbm [resolvable:$true] %s440
      %443 = dma.vmem_to_hbm [thread:$0]  %s439, 128, %s441, [#allocation4]
    $region49: #{tpu_custom_call.1} parent=1 // pred_fallthru
      _
    // Predicated region
    $region50: #{tpu_custom_call.1} parent=1 // pred_check
      _
    $region51: #{tpu_custom_call.1} parent=1 // pred_check_branch
      %445 = sbr.rel (0) target = $region53
    $region52: #{tpu_custom_call.1} parent=1 // pred_region
      %447 = dma.done [#allocation4], 128
    $region53: #{tpu_custom_call.1} parent=1 // pred_fallthru
      _
    %448 = vsyncpa [#allocation3], 1
    %449 = vsyncpa [#allocation6], 1
    %450 = vsyncpa [#allocation9], 1
    %451 = vsyncpa [#allocation4], 1

</llo_original>
